<compile_context>
chip_gen: v6e
topology: v6e:2x2x1
jax: 0.10.0
libtpu: 0.0.40
codegen_flags: <defaults>
</compile_context>

<pallas_src>
from functools import partial

import numpy as np
import jax
import jax.numpy as jnp
from jax.experimental import pallas as pl
from jax.experimental.pallas import tpu as pltpu

MA_KERNEL = 25   # series_decomp moving-average kernel size (fixed in the module)
CONV_K = 3       # Projector series_conv kernel size


def _round_up(a, b):
    return ((a + b - 1) // b) * b


def _pick_tile(total, cap=1024, min_steps=1):
    """Largest multiple-of-128 tile <= cap that divides `total` (itself a
    multiple of 128) while leaving at least `min_steps` grid steps."""
    best = 128
    for t in range(128, min(cap, total) + 1, 128):
        if total % t == 0 and total // t >= min_steps:
            best = t
    return best


# ----------------------------------------------------------------------------
# Pallas kernel: normalize -> one fused [2P, L] MXU matmul -> fused epilogue
# ----------------------------------------------------------------------------
def _dlinear_kernel(x_ref, w_ref, mean_ref, inv_std_ref, tau_std_ref,
                    std_ref, d_ref, out_ref):
    Pp = out_ref.shape[0]
    # normalize with a multiply (inv_std precomputed in the wrapper)
    xn = (x_ref[...] - mean_ref[...]) * inv_std_ref[...]               # [L, lanes]
    # seasonal + trend heads with the moving average folded into the weights
    mm = jnp.dot(w_ref[...], xn, preferred_element_type=jnp.float32)   # [2Pp, lanes]
    # fused de-stationarization + de-normalization epilogue, single store
    y = (mm[:Pp, :] * tau_std_ref[...]
         + (d_ref[...] + mm[Pp:, :]) * std_ref[...]
         + mean_ref[...])
    out_ref[...] = y.astype(out_ref.dtype)


# ----------------------------------------------------------------------------
# Layout wrappers around the kernel
# ----------------------------------------------------------------------------
def _forward_lane_folded(x32, w_fused, mean, std, inv_std, tau_std, d, P):
    """Small-C path: fold batch*channel into a lane-dense axis [time, B*C]."""
    B, L, C = x32.shape
    P_pad = w_fused.shape[0] // 2
    n = B * C
    n_pad = _round_up(n, 128)
    lane_tile = _pick_tile(n_pad, cap=1024, min_steps=2 if n_pad > 128 else 1)
    pad = n_pad - n

    x_lanes = jnp.transpose(x32, (1, 0, 2)).reshape(L, n)               # [L, B*C]
    mean_l = mean.reshape(1, n)
    std_l = std.reshape(1, n)
    inv_l = inv_std.reshape(1, n)
    tau_std_l = tau_std.reshape(1, n)
    d_lanes = jnp.broadcast_to(d.T[:, :, None], (P_pad, B, C)).reshape(P_pad, n)

    if pad:
        lp = ((0, 0), (0, pad))
        x_lanes = jnp.pad(x_lanes, lp)
        mean_l = jnp.pad(mean_l, lp)
        std_l = jnp.pad(std_l, lp, constant_values=1.0)
        inv_l = jnp.pad(inv_l, lp, constant_values=1.0)
        tau_std_l = jnp.pad(tau_std_l, lp)
        d_lanes = jnp.pad(d_lanes, lp)

    grid = (n_pad // lane_tile,)
    out = pl.pallas_call(
        _dlinear_kernel,
        out_shape=jax.ShapeDtypeStruct((P_pad, n_pad), jnp.float32),
        grid=grid,
        in_specs=[
            pl.BlockSpec((L, lane_tile), lambda j: (0, j)),        # x (lane layout)
            pl.BlockSpec((2 * P_pad, L), lambda j: (0, 0)),        # fused head weight
            pl.BlockSpec((1, lane_tile), lambda j: (0, j)),        # mean
            pl.BlockSpec((1, lane_tile), lambda j: (0, j)),        # inv_std
            pl.BlockSpec((1, lane_tile), lambda j: (0, j)),        # tau*std
            pl.BlockSpec((1, lane_tile), lambda j: (0, j)),        # std
            pl.BlockSpec((P_pad, lane_tile), lambda j: (0, j)),    # sb*tau+trb+delta
        ],
        out_specs=pl.BlockSpec((P_pad, lane_tile), lambda j: (0, j)),
        compiler_params=pltpu.CompilerParams(
            dimension_semantics=("parallel",),
            vmem_limit_bytes=48 * 1024 * 1024),
    )(x_lanes, w_fused, mean_l, inv_l, tau_std_l, std_l, d_lanes)

    y = out[:P, :n].reshape(P, B, C)                                     # drop padding
    return jnp.transpose(y, (1, 0, 2))                                   # [B, P, C]


def _forward_batch_grid(x32, w_fused, mean, std, inv_std, tau_std, d, P):
    """Large-C path: grid over (batch, channel tiles); no x transpose and no
    [L, B*C] delta expansion; output produced directly as [B, P, C]."""
    B, L, C = x32.shape
    P_pad = w_fused.shape[0] // 2
    C_pad = _round_up(C, 128)
    c_tile = _pick_tile(C_pad, cap=1024, min_steps=1)
    padc = C_pad - C

    if padc:
        p3 = ((0, 0), (0, 0), (0, padc))
        x32 = jnp.pad(x32, p3)
        mean = jnp.pad(mean, p3)
        std = jnp.pad(std, p3, constant_values=1.0)
        inv_std = jnp.pad(inv_std, p3, constant_values=1.0)
        tau_std = jnp.pad(tau_std, p3)
    d3 = d[:, :, None]                                                   # [B, P_pad, 1]

    grid = (B, C_pad // c_tile)
    out = pl.pallas_call(
        _dlinear_kernel,
        out_shape=jax.ShapeDtypeStruct((B, P_pad, C_pad), jnp.float32),
        grid=grid,
        in_specs=[
            pl.BlockSpec((None, L, c_tile), lambda b, j: (b, 0, j)),     # x
            pl.BlockSpec((2 * P_pad, L), lambda b, j: (0, 0)),           # fused weight
            pl.BlockSpec((None, 1, c_tile), lambda b, j: (b, 0, j)),     # mean
            pl.BlockSpec((None, 1, c_tile), lambda b, j: (b, 0, j)),     # inv_std
            pl.BlockSpec((None, 1, c_tile), lambda b, j: (b, 0, j)),     # tau*std
            pl.BlockSpec((None, 1, c_tile), lambda b, j: (b, 0, j)),     # std
            pl.BlockSpec((None, P_pad, 1), lambda b, j: (b, 0, 0)),      # offset column
        ],
        out_specs=pl.BlockSpec((None, P_pad, c_tile), lambda b, j: (b, 0, j)),
        compiler_params=pltpu.CompilerParams(
            dimension_semantics=("parallel", "parallel"),
            vmem_limit_bytes=48 * 1024 * 1024),
    )(x32, w_fused, mean, inv_std, tau_std, std, d3)

    return out[:, :P, :C]


# ----------------------------------------------------------------------------
# Wrapper helpers (plain XLA; hoisted tiny ops)
# ----------------------------------------------------------------------------
def _projector(x_raw, stats_row, conv_w, w1, b1, w2, b2, w3):
    """Projector (circular series_conv + 2-hidden-layer MLP), batched over B."""
    B, L, C = x_raw.shape
    # Conv1d(in=seq_len, out=1, k=3, circular padding) over the channel axis.
    xpad = jnp.concatenate([x_raw[:, :, -1:], x_raw, x_raw[:, :, :1]], axis=2)
    conv = jnp.zeros((B, C), jnp.float32)
    for k in range(CONV_K):
        conv = conv + jnp.einsum("blc,l->bc", xpad[:, :, k:k + C], conv_w[:, k])
    inp = jnp.concatenate([conv, stats_row], axis=1)                     # [B, 2C]
    h = jax.nn.relu(inp @ w1.T + b1[:, 0])
    h = jax.nn.relu(h @ w2.T + b2[:, 0])
    return h @ w3.T


def _moving_avg_matrix_np(L):
    """[L, L] operator equal to the replicate-padded 25-tap moving average."""
    half = (MA_KERNEL - 1) // 2
    M = np.zeros((L, L), np.float32)
    for lp in range(L):
        for k in range(MA_KERNEL):
            M[lp, min(max(lp + k - half, 0), L - 1)] += 1.0 / MA_KERNEL
    return M


def prepare_params(params, seq_len, pred_len):
    """One-time (per parameter set) preprocessing hoisted out of the forward:
    folds the moving-average decomposition into the Linear heads and pads the
    head row count to a sublane-aligned multiple of 8 (extra rows are zero)."""
    p = {k: jnp.asarray(v, jnp.float32) for k, v in params.items()}
    L, P = seq_len, pred_len
    P_pad = _round_up(P, 8)
    M = jnp.asarray(_moving_avg_matrix_np(L))
    eye = jnp.eye(L, dtype=jnp.float32)
    w_seas = p["sw"] @ (eye - M)                                         # [P, L]
    w_trend = p["trw"] @ M                                               # [P, L]
    rpad = ((0, P_pad - P), (0, 0))
    w_fused = jnp.concatenate([jnp.pad(w_seas, rpad), jnp.pad(w_trend, rpad)],
                              axis=0)                                    # [2*P_pad, L]
    prepped = {k: v for k, v in p.items()
               if k.startswith("tau_") or k.startswith("delta_")}
    prepped["w_fused"] = w_fused
    prepped["sb_pad"] = jnp.pad(p["sb"][:, 0], (0, P_pad - P))           # [P_pad]
    prepped["trb_pad"] = jnp.pad(p["trb"][:, 0], (0, P_pad - P))         # [P_pad]
    return prepped


@partial(jax.jit, static_argnames=("pred_len",))
def model_forward(x_enc, prepped, pred_len):
    B, L, C = x_enc.shape
    P = pred_len
    assert P == L, "original model's delta broadcast requires pred_len == seq_len"

    x32 = x_enc.astype(jnp.float32)
    P_pad = prepped["w_fused"].shape[0] // 2

    # instance-norm statistics (computed once; shared by projectors and kernel)
    mean = jnp.mean(x32, axis=1, keepdims=True)                          # [B,1,C]
    xc = x32 - mean
    var = jnp.mean((xc - jnp.mean(xc, axis=1, keepdims=True)) ** 2,
                   axis=1, keepdims=True)
    std = jnp.sqrt(var + 1e-5)                                           # [B,1,C]
    inv_std = 1.0 / std           # kernel multiplies; f32 divide hoisted out

    # de-stationary factors (tiny MLPs; hoisted to batched XLA ops)
    tau = jnp.exp(_projector(x32, std[:, 0, :], prepped["tau_conv_w"],
                             prepped["tau_w1"], prepped["tau_b1"],
                             prepped["tau_w2"], prepped["tau_b2"],
                             prepped["tau_w3"]))                         # [B,1]
    delta = _projector(x32, mean[:, 0, :], prepped["delta_conv_w"],
                       prepped["delta_w1"], prepped["delta_b1"],
                       prepped["delta_w2"], prepped["delta_b2"],
                       prepped["delta_w3"])                              # [B,L]

    # fold seasonal/trend biases + delta into one per-(batch, step) offset
    delta_pad = jnp.pad(delta, ((0, 0), (0, P_pad - P)))                 # [B,P_pad]
    d = prepped["sb_pad"][None, :] * tau + prepped["trb_pad"][None, :] + delta_pad
    tau_std = tau[:, :, None] * std                                      # [B,1,C]

    if C >= 128:
        return _forward_batch_grid(x32, prepped["w_fused"], mean, std,
                                   inv_std, tau_std, d, P)
    return _forward_lane_folded(x32, prepped["w_fused"], mean, std,
                                inv_std, tau_std, d, P)


# ----------------------------------------------------------------------------
# Parameter init (same layout as the PyTorch module's tensors)
# ----------------------------------------------------------------------------
def init_params(key, L, P, C, hidden_dims):
    ks = jax.random.split(key, 16)
    scale = 0.1

    def rnd(k, shape):
        return jax.random.normal(k, shape, jnp.float32) * scale

    H0, H1 = hidden_dims
    return dict(
        # tau_learner (Projector, output_dim=1)
        tau_conv_w=rnd(ks[0], (L, CONV_K)),          # Conv1d weight [1, L, 3] squeezed
        tau_w1=rnd(ks[1], (H0, 2 * C)), tau_b1=rnd(ks[2], (H0, 1)),
        tau_w2=rnd(ks[3], (H1, H0)),    tau_b2=rnd(ks[4], (H1, 1)),
        tau_w3=rnd(ks[5], (1, H1)),
        # delta_learner (Projector, output_dim=seq_len)
        delta_conv_w=rnd(ks[6], (L, CONV_K)),
        delta_w1=rnd(ks[7], (H0, 2 * C)), delta_b1=rnd(ks[8], (H0, 1)),
        delta_w2=rnd(ks[9], (H1, H0)),    delta_b2=rnd(ks[10], (H1, 1)),
        delta_w3=rnd(ks[11], (L, H1)),
        # DLinear heads (individual=False): Linear(seq_len -> pred_len)
        sw=rnd(ks[12], (P, L)), sb=rnd(ks[13], (P, 1)),
        trw=rnd(ks[14], (P, L)), trb=rnd(ks[15], (P, 1)),
    )


# ----------------------------------------------------------------------------
# Pure-JAX reference mirroring the PyTorch forward (for validation)
# ----------------------------------------------------------------------------
def reference_forward(x, p, pred_len):
    B, L, C = x.shape
    mean = jnp.mean(x, axis=1, keepdims=True)
    xc = x - mean
    var = jnp.mean((xc - jnp.mean(xc, axis=1, keepdims=True)) ** 2, axis=1, keepdims=True)
    std = jnp.sqrt(var + 1e-5)
    xn = xc / std

    def projector(conv_w, w1, b1, w2, b2, w3, stats):
        xpad = jnp.concatenate([x[:, :, -1:], x, x[:, :, :1]], axis=2)   # circular pad
        conv = jnp.zeros((B, C), jnp.float32)
        for k in range(CONV_K):
            conv = conv + jnp.einsum("blc,l->bc", xpad[:, :, k:k + C], conv_w[:, k])
        inp = jnp.concatenate([conv, stats[:, 0, :]], axis=1)            # [B, 2C]
        h = jax.nn.relu(inp @ w1.T + b1[:, 0])
        h = jax.nn.relu(h @ w2.T + b2[:, 0])
        return h @ w3.T

    tau = jnp.exp(projector(p["tau_conv_w"], p["tau_w1"], p["tau_b1"],
                            p["tau_w2"], p["tau_b2"], p["tau_w3"], std))      # [B, 1]
    delta = projector(p["delta_conv_w"], p["delta_w1"], p["delta_b1"],
                      p["delta_w2"], p["delta_b2"], p["delta_w3"], mean)      # [B, L]

    half = (MA_KERNEL - 1) // 2
    xp_ = jnp.concatenate([jnp.repeat(xn[:, :1, :], half, axis=1), xn,
                           jnp.repeat(xn[:, -1:, :], half, axis=1)], axis=1)
    mm = sum(xp_[:, k:k + L, :] for k in range(MA_KERNEL)) / float(MA_KERNEL)
    res = xn - mm

    seas = jnp.einsum("blc,pl->bpc", res, p["sw"]) + p["sb"][:, 0][None, :, None]
    trend = jnp.einsum("blc,pl->bpc", mm, p["trw"]) + p["trb"][:, 0][None, :, None]
    seas = seas * tau[:, :, None] + delta[:, :, None]
    y = (seas + trend) * std + mean
    return y[:, -pred_len:, :]


if __name__ == "__main__":
    HIDDEN_DIMS = [32, 32]          # p_hidden_dims, p_hidden_layers = 2
    key = jax.random.PRNGKey(0)
    k1, k2, k3, k4 = jax.random.split(key, 4)

    # --- small-C case (exercises the lane-folded path) ---
    B, SEQ_LEN, PRED_LEN, ENC_IN = 2, 8, 8, 4
    x_enc = jax.random.normal(k1, (B, SEQ_LEN, ENC_IN), jnp.float32)
    params = init_params(k2, SEQ_LEN, PRED_LEN, ENC_IN, HIDDEN_DIMS)
    prepped = prepare_params(params, SEQ_LEN, PRED_LEN)
    out = jax.block_until_ready(model_forward(x_enc, prepped, PRED_LEN))
    ref = reference_forward(x_enc, params, PRED_LEN)
    assert out.shape == (B, PRED_LEN, ENC_IN)
    if not bool(jnp.allclose(out, ref, rtol=1e-4, atol=1e-4)):
        raise AssertionError("lane-folded path does not match JAX reference")

    # --- large-C case (exercises the per-batch channel-tile path) ---
    C_BIG = 128
    x_big = jax.random.normal(k3, (B, SEQ_LEN, C_BIG), jnp.float32)
    params_big = init_params(k4, SEQ_LEN, PRED_LEN, C_BIG, HIDDEN_DIMS)
    prepped_big = prepare_params(params_big, SEQ_LEN, PRED_LEN)
    out_big = jax.block_until_ready(model_forward(x_big, prepped_big, PRED_LEN))
    ref_big = reference_forward(x_big, params_big, PRED_LEN)
    assert out_big.shape == (B, PRED_LEN, C_BIG)
    if not bool(jnp.allclose(out_big, ref_big, rtol=1e-4, atol=1e-4)):
        raise AssertionError("batch-grid path does not match JAX reference")

    print("KERNEL_OK")
</pallas_src>

<mosaic_0001>
module attributes {stable_mosaic.version = 11 : i64} {
  func.func @_dlinear_kernel(%arg0: i32, %arg1: memref<8x128xf32, #tpu.memory_space<vmem>>, %arg2: memref<16x8xf32, #tpu.memory_space<vmem>>, %arg3: memref<1x128xf32, #tpu.memory_space<vmem>>, %arg4: memref<1x128xf32, #tpu.memory_space<vmem>>, %arg5: memref<1x128xf32, #tpu.memory_space<vmem>>, %arg6: memref<1x128xf32, #tpu.memory_space<vmem>>, %arg7: memref<8x128xf32, #tpu.memory_space<vmem>>, %arg8: memref<8x128xf32, #tpu.memory_space<vmem>>) attributes {dimension_semantics = [#tpu.dimension_semantics<parallel>], iteration_bounds = array<i64: 1>, scalar_prefetch = 0 : i64, scratch_operands = 0 : i64, tpu.core_type = #tpu.core_type<tc>, window_params = [{transform_indices = @transform_0, window_bounds = array<i64: 8, 128>}, {pipeline_mode = #tpu.pipeline_mode<synchronous>, transform_indices = @transform_1, window_bounds = array<i64: 16, 8>}, {transform_indices = @transform_2, window_bounds = array<i64: 1, 128>}, {transform_indices = @transform_3, window_bounds = array<i64: 1, 128>}, {transform_indices = @transform_4, window_bounds = array<i64: 1, 128>}, {transform_indices = @transform_5, window_bounds = array<i64: 1, 128>}, {transform_indices = @transform_6, window_bounds = array<i64: 8, 128>}, {transform_indices = @transform_7, window_bounds = array<i64: 8, 128>}]} {
    %c0 = arith.constant 0 : index
    %c0_0 = arith.constant 0 : index
    %0 = vector.load %arg1[%c0, %c0_0] : memref<8x128xf32, #tpu.memory_space<vmem>>, vector<8x128xf32>
    %c0_1 = arith.constant 0 : index
    %c0_2 = arith.constant 0 : index
    %1 = vector.load %arg3[%c0_1, %c0_2] : memref<1x128xf32, #tpu.memory_space<vmem>>, vector<1x128xf32>
    %2 = vector.broadcast %1 : vector<1x128xf32> to vector<8x128xf32>
    %3 = arith.subf %0, %2 : vector<8x128xf32>
    %c0_3 = arith.constant 0 : index
    %c0_4 = arith.constant 0 : index
    %4 = vector.load %arg4[%c0_3, %c0_4] : memref<1x128xf32, #tpu.memory_space<vmem>>, vector<1x128xf32>
    %5 = vector.broadcast %4 : vector<1x128xf32> to vector<8x128xf32>
    %6 = arith.mulf %3, %5 : vector<8x128xf32>
    %c0_5 = arith.constant 0 : index
    %c0_6 = arith.constant 0 : index
    %7 = vector.load %arg2[%c0_5, %c0_6] : memref<16x8xf32, #tpu.memory_space<vmem>>, vector<16x8xf32>
    %cst = arith.constant dense<0.000000e+00> : vector<16x128xf32>
    %8 = tpu.matmul %7, %6, %cst {dimension_numbers = #tpu.dot_dimension_numbers<[1], [0], [0], [1], [0, 0, 1, 1], [], []>} : vector<16x8xf32>, vector<8x128xf32>, vector<16x128xf32> -> vector<16x128xf32>
    %9 = vector.extract_strided_slice %8 {offsets = [0, 0], sizes = [8, 128], strides = [1, 1]} : vector<16x128xf32> to vector<8x128xf32>
    %c0_7 = arith.constant 0 : index
    %c0_8 = arith.constant 0 : index
    %10 = vector.load %arg5[%c0_7, %c0_8] : memref<1x128xf32, #tpu.memory_space<vmem>>, vector<1x128xf32>
    %11 = vector.broadcast %10 : vector<1x128xf32> to vector<8x128xf32>
    %12 = arith.mulf %9, %11 : vector<8x128xf32>
    %c0_9 = arith.constant 0 : index
    %c0_10 = arith.constant 0 : index
    %13 = vector.load %arg7[%c0_9, %c0_10] : memref<8x128xf32, #tpu.memory_space<vmem>>, vector<8x128xf32>
    %14 = vector.extract_strided_slice %8 {offsets = [8, 0], sizes = [8, 128], strides = [1, 1]} : vector<16x128xf32> to vector<8x128xf32>
    %15 = arith.addf %13, %14 : vector<8x128xf32>
    %c0_11 = arith.constant 0 : index
    %c0_12 = arith.constant 0 : index
    %16 = vector.load %arg6[%c0_11, %c0_12] : memref<1x128xf32, #tpu.memory_space<vmem>>, vector<1x128xf32>
    %17 = vector.broadcast %16 : vector<1x128xf32> to vector<8x128xf32>
    %18 = arith.mulf %15, %17 : vector<8x128xf32>
    %19 = arith.addf %12, %18 : vector<8x128xf32>
    %c0_13 = arith.constant 0 : index
    %c0_14 = arith.constant 0 : index
    %20 = vector.load %arg3[%c0_13, %c0_14] : memref<1x128xf32, #tpu.memory_space<vmem>>, vector<1x128xf32>
    %21 = vector.broadcast %20 : vector<1x128xf32> to vector<8x128xf32>
    %22 = arith.addf %19, %21 : vector<8x128xf32>
    %c0_15 = arith.constant 0 : index
    %c0_16 = arith.constant 0 : index
    %23 = vector.load %arg8[%c0_15, %c0_16] : memref<8x128xf32, #tpu.memory_space<vmem>>, vector<8x128xf32>
    tpu.vector_store %arg8[%c0_15, %c0_16], %22 {strides = array<i32>} : memref<8x128xf32, #tpu.memory_space<vmem>>, vector<8x128xf32>,
    return
  }
  func.func @transform_0(%arg0: i32) -> (i32, i32) {
    %c0_i32 = arith.constant 0 : i32
    %c0_i32_0 = arith.constant 0 : i32
    return %c0_i32, %arg0 : i32, i32
  }
  func.func @transform_1(%arg0: i32) -> (i32, i32) {
    %c0_i32 = arith.constant 0 : i32
    %c0_i32_0 = arith.constant 0 : i32
    %c0_i32_1 = arith.constant 0 : i32
    return %c0_i32, %c0_i32_0 : i32, i32
  }
  func.func @transform_2(%arg0: i32) -> (i32, i32) {
    %c0_i32 = arith.constant 0 : i32
    %c0_i32_0 = arith.constant 0 : i32
    return %c0_i32, %arg0 : i32, i32
  }
  func.func @transform_3(%arg0: i32) -> (i32, i32) {
    %c0_i32 = arith.constant 0 : i32
    %c0_i32_0 = arith.constant 0 : i32
    return %c0_i32, %arg0 : i32, i32
  }
  func.func @transform_4(%arg0: i32) -> (i32, i32) {
    %c0_i32 = arith.constant 0 : i32
    %c0_i32_0 = arith.constant 0 : i32
    return %c0_i32, %arg0 : i32, i32
  }
  func.func @transform_5(%arg0: i32) -> (i32, i32) {
    %c0_i32 = arith.constant 0 : i32
    %c0_i32_0 = arith.constant 0 : i32
    return %c0_i32, %arg0 : i32, i32
  }
  func.func @transform_6(%arg0: i32) -> (i32, i32) {
    %c0_i32 = arith.constant 0 : i32
    %c0_i32_0 = arith.constant 0 : i32
    return %c0_i32, %arg0 : i32, i32
  }
  func.func @transform_7(%arg0: i32) -> (i32, i32) {
    %c0_i32 = arith.constant 0 : i32
    %c0_i32_0 = arith.constant 0 : i32
    return %c0_i32, %arg0 : i32, i32
  }
}

</mosaic_0001>

<llo_original>
// kernel: mul.9
$region0: #{mul.9}
  #allocation0 [shape = 's32[1]{0}', space=sflag, size = 0x4, scoped, tag = 'scoped memory for mul.9']
  %s0 = inlined_call_operand.vmem [shape: f32[1,8], index: 0, kind: input, shape index: {}]
  %s1 = inlined_call_operand.vmem [shape: f32[1,8], index: 1, kind: input, shape index: {}]
  %s2 = inlined_call_operand.vmem [shape: f32[1,8], index: 2, kind: output, shape index: {}]
  %v3 = vld [vmem:[%s0] sm:$0x1]
  %v4 = vld [vmem:[%s1] sm:$0x1]
  %5 = xla_tuple %v3, %v4
  %6 = xla_tuple %5
  %v7 = vmul.f32 %v3, %v4
  %8 = xla_tuple %v7
  %9 = vst [vmem:[%s2] sm:$0x1] %v7

// kernel: model_forward.1
$region0: #{model_forward.1}
  #allocation0 [shape = 'u32[]', space=smem, size = 0x4, offset = 0x4, fixed_abs, tag = 'smem constant byte address 0x4 - core index']
  #allocation1 [shape = 'u32[144,128]{1,0:T(1,128)}', space=vmem, size = 0x12000, scoped, tag = 'internal scratch']
  %s0 = inlined_call_operand.vmem [shape: f32[8,128], index: 0, kind: input, shape index: {}]
  %s1 = inlined_call_operand.vmem [shape: f32[16,8], index: 1, kind: input, shape index: {}]
  %s2 = inlined_call_operand.vmem [shape: f32[1,128], index: 2, kind: input, shape index: {}]
  %s3 = inlined_call_operand.vmem [shape: f32[1,128], index: 3, kind: input, shape index: {}]
  %s4 = inlined_call_operand.vmem [shape: f32[1,128], index: 4, kind: input, shape index: {}]
  %s5 = inlined_call_operand.vmem [shape: f32[1,128], index: 5, kind: input, shape index: {}]
  %s6 = inlined_call_operand.vmem [shape: f32[8,128], index: 6, kind: input, shape index: {}]
  %s7 = inlined_call_operand.vmem [shape: f32[8,128], index: 7, kind: output, shape index: {}]
  %s8 = sld [smem:[#allocation0]]
  $region38: #{model_forward.1} parent=0
    _
  %s10 = ssub.s32 1, %s8
  %s11 = scalar_select 0, %s10, %s8
  // Predicated region
  $region2: #{model_forward.1} parent=0 // pred_check
    _
  $region3: #{model_forward.1} parent=0 // pred_check_branch
    %13 = sbr.rel (0) target = $region5
  $region4: #{model_forward.1} parent=0 // pred_region
    _
  $region5: #{model_forward.1} parent=0 // pred_fallthru
    _
  // Predicated region
  $region6: #{model_forward.1} parent=0 // pred_check
    _
  $region7: #{model_forward.1} parent=0 // pred_check_branch
    %15 = sbr.rel (0) target = $region9
  $region8: #{model_forward.1} parent=0 // pred_region
    _
  $region9: #{model_forward.1} parent=0 // pred_fallthru
    _
  // Predicated region
  $region10: #{model_forward.1} parent=0 // pred_check
    _
  $region11: #{model_forward.1} parent=0 // pred_check_branch
    %17 = sbr.rel (0) target = $region13
  $region12: #{model_forward.1} parent=0 // pred_region
    _
  $region13: #{model_forward.1} parent=0 // pred_fallthru
    _
  // Predicated region
  $region14: #{model_forward.1} parent=0 // pred_check
    _
  $region15: #{model_forward.1} parent=0 // pred_check_branch
    %19 = sbr.rel (0) target = $region17
  $region16: #{model_forward.1} parent=0 // pred_region
    _
  $region17: #{model_forward.1} parent=0 // pred_fallthru
    _
  // Predicated region
  $region18: #{model_forward.1} parent=0 // pred_check
    _
  $region19: #{model_forward.1} parent=0 // pred_check_branch
    %21 = sbr.rel (0) target = $region21
  $region20: #{model_forward.1} parent=0 // pred_region
    _
  $region21: #{model_forward.1} parent=0 // pred_fallthru
    _
  // Predicated region
  $region22: #{model_forward.1} parent=0 // pred_check
    _
  $region23: #{model_forward.1} parent=0 // pred_check_branch
    %23 = sbr.rel (0) target = $region25
  $region24: #{model_forward.1} parent=0 // pred_region
    _
  $region25: #{model_forward.1} parent=0 // pred_fallthru
    _
  // Predicated region
  $region26: #{model_forward.1} parent=0 // pred_check
    _
  $region27: #{model_forward.1} parent=0 // pred_check_branch
    %25 = sbr.rel (0) target = $region29
  $region28: #{model_forward.1} parent=0 // pred_region
    _
  $region29: #{model_forward.1} parent=0 // pred_fallthru
    _
  %v26 = vld [vmem:[%s0] sm:$0xff]
  %v27 = vld [vmem:[%s2] sm:$0x1]
  %v29 = vlaneseq
  %v30 = vshrl.u32 %v29, 7
  %v31 = vsub.s32 0, %v30
  %v32 = vrot.slane %v27, %v31
  %v34 = vsub.f32 %v26, %v32
  %v35 = vld [vmem:[%s3] sm:$0x1]
  %v37 = vlaneseq
  %v38 = vshrl.u32 %v37, 7
  %v39 = vsub.s32 0, %v38
  %v40 = vrot.slane %v35, %v39
  %v42 = vmul.f32 %v34, %v40
  %v43 = vld [vmem:[%s1] sm:$0xff]
  %v44 = vld [vmem:[%s1 + $0x8] sm:$0xff]
  %vm45 = vcmask 64512
  %v47 = vsel %vm45, %v43, 0
  %v50 = vsel %vm45, %v44, 0
  %52 = vmatprep.subr.mxu0 0.0
  %53 = vmatpush1.msra.mxu0 0.0
  %54 = vmatprep.subr.mxu0 0.0
  %55 = vmatpush1.msra.mxu0 0.0
  %56 = vmatprep.subr.mxu0 0.0
  %57 = vmatpush1.msra.mxu0 0.0
  %58 = vmatprep.subr.mxu0 0.0
  %59 = vmatpush1.msra.mxu0 0.0
  %60 = vmatprep.subr.mxu0 0.0
  %61 = vmatpush1.msra.mxu0 0.0
  %62 = vmatprep.subr.mxu0 0.0
  %63 = vmatpush1.msra.mxu0 0.0
  %64 = vmatprep.subr.mxu0 0.0
  %65 = vmatpush1.msra.mxu0 0.0
  %66 = vmatprep.subr.mxu0 0.0
  %67 = vmatpush1.msra.mxu0 0.0
  %68 = vmatprep.subr.mxu0 0.0
  %69 = vmatpush1.msra.mxu0 0.0
  %70 = vmatprep.subr.mxu0 0.0
  %71 = vmatpush1.msra.mxu0 0.0
  %72 = vmatprep.subr.mxu0 0.0
  %73 = vmatpush1.msra.mxu0 0.0
  %74 = vmatprep.subr.mxu0 0.0
  %75 = vmatpush1.msra.mxu0 0.0
  %76 = vmatprep.subr.mxu0 0.0
  %77 = vmatpush1.msra.mxu0 0.0
  %78 = vmatprep.subr.mxu0 0.0
  %79 = vmatpush1.msra.mxu0 0.0
  %80 = vmatprep.subr.mxu0 0.0
  %81 = vmatpush1.msra.mxu0 0.0
  %82 = vmatprep.subr.mxu0 0.0
  %83 = vmatpush1.msra.mxu0 %v42
  %84 = vmatprep.subr.mxu0 0.0
  %85 = vmatpush2.msra.mxu0 0.0
  %86 = vmatprep.subr.mxu0 0.0
  %87 = vmatpush2.msra.mxu0 0.0
  %88 = vmatprep.subr.mxu0 0.0
  %89 = vmatpush2.msra.mxu0 0.0
  %90 = vmatprep.subr.mxu0 0.0
  %91 = vmatpush2.msra.mxu0 0.0
  %92 = vmatprep.subr.mxu0 0.0
  %93 = vmatpush2.msra.mxu0 0.0
  %94 = vmatprep.subr.mxu0 0.0
  %95 = vmatpush2.msra.mxu0 0.0
  %96 = vmatprep.subr.mxu0 0.0
  %97 = vmatpush2.msra.mxu0 0.0
  %98 = vmatprep.subr.mxu0 0.0
  %99 = vmatpush2.msra.mxu0 0.0
  %100 = vmatprep.subr.mxu0 0.0
  %101 = vmatpush2.msra.mxu0 0.0
  %102 = vmatprep.subr.mxu0 0.0
  %103 = vmatpush2.msra.mxu0 0.0
  %104 = vmatprep.subr.mxu0 0.0
  %105 = vmatpush2.msra.mxu0 0.0
  %106 = vmatprep.subr.mxu0 0.0
  %107 = vmatpush2.msra.mxu0 0.0
  %108 = vmatprep.subr.mxu0 0.0
  %109 = vmatpush2.msra.mxu0 0.0
  %110 = vmatprep.subr.mxu0 0.0
  %111 = vmatpush2.msra.mxu0 0.0
  %112 = vmatprep.subr.mxu0 0.0
  %113 = vmatpush2.msra.mxu0 0.0
  %114 = vmatprep.subr.mxu0 0.0
  %115 = vmatpush2.msra.mxu0 0.0
  %116 = vmatprep.mubr.f32.mxu0 0.0
  %117 = vmatmul.mubr.f32.gmra.mxu0 %v47
  %v118 = vpop.f32.mrf.mxu0
  %v119 = vadd.f32 0.0, %v118
  %v120 = vpop.f32.mrf.mxu0
  %121 = vmatprep.mubr.f32.mxu0 0.0
  %122 = vmatmul.mubr.f32.gmra.mxu0 %v50
  %v123 = vpop.f32.mrf.mxu0
  %v124 = vadd.f32 0.0, %v123
  %v125 = vpop.f32.mrf.mxu0
  %126 = vdwg.mxu0
  %v127 = vld [vmem:[%s4] sm:$0x1]
  %v129 = vlaneseq
  %v130 = vshrl.u32 %v129, 7
  %v131 = vsub.s32 0, %v130
  %v132 = vrot.slane %v127, %v131
  %v134 = vmul.f32 %v119, %v132
  %v135 = vld [vmem:[%s6] sm:$0xff]
  %v136 = vadd.f32 %v135, %v124
  %v137 = vld [vmem:[%s5] sm:$0x1]
  %v139 = vlaneseq
  %v140 = vshrl.u32 %v139, 7
  %v141 = vsub.s32 0, %v140
  %v142 = vrot.slane %v137, %v141
  %v144 = vmul.f32 %v136, %v142
  %v145 = vadd.f32 %v134, %v144
  %v146 = vadd.f32 %v145, %v32
  %147 = vst [vmem:[%s7] sm:$0xff] %v146
  // Predicated region
  $region30: #{model_forward.1} parent=0 // pred_check
    _
  $region31: #{model_forward.1} parent=0 // pred_check_branch
    %149 = sbr.rel (0) target = $region33
  $region32: #{model_forward.1} parent=0 // pred_region
    _
  $region33: #{model_forward.1} parent=0 // pred_fallthru
    _
  // Predicated region
  $region34: #{model_forward.1} parent=0 // pred_check
    _
  $region35: #{model_forward.1} parent=0 // pred_check_branch
    %151 = sbr.rel (0) target = $region37
  $region36: #{model_forward.1} parent=0 // pred_region
    _
  $region37: #{model_forward.1} parent=0 // pred_fallthru
    _

</llo_original>
